<compile_context>
chip_gen: v7x
topology: tpu7x:2x2x1
jax: 0.10.0
libtpu: 0.0.40
codegen_flags: <defaults>
</compile_context>

<pallas_src>
import functools

import jax
import jax.numpy as jnp
from jax.experimental import pallas as pl
from jax.experimental.pallas import tpu as pltpu


def _round_up(n: int, m: int) -> int:
    return (n + m - 1) // m * m


def mlp_kernel(x_ref, w1_ref, b1_ref, w2_ref, b2_ref, o_ref):
    # First matmul: bf16 MXU operands, f32 accumulation.  The f32->bf16 cast of
    # x happens here, in-register, instead of as a separate XLA pass over HBM.
    h = jnp.dot(x_ref[...].astype(jnp.bfloat16), w1_ref[...],
                preferred_element_type=jnp.float32)
    h = jnp.maximum(h + b1_ref[...], 0.0)
    # Second matmul in f32 (avoids double quantization; compute is free here).
    y = jnp.dot(h, w2_ref[...], preferred_element_type=jnp.float32)
    o_ref[...] = (y + b2_ref[...]).astype(o_ref.dtype)


def prepare_params(w1, b1, w2, b2):
    """One-time parameter prep: pad the hidden dim to lane width (128), cast
    W1 to bf16 for the first MXU matmul, keep W2/biases in f32.  Weights are
    stored transposed as (in_features, out_features)."""
    n_input, n_hidden = w1.shape
    n_output = w2.shape[1]
    nh_p = _round_up(n_hidden, 128)
    w1p = jnp.zeros((n_input, nh_p), jnp.bfloat16)
    w1p = w1p.at[:, :n_hidden].set(w1.astype(jnp.bfloat16))
    b1p = jnp.zeros((1, nh_p), jnp.float32)
    b1p = b1p.at[:, :n_hidden].set(b1.reshape(1, -1).astype(jnp.float32))
    # Padded hidden lanes are relu(0 + 0) = 0, and the matching padded rows of
    # W2 are 0, so they contribute nothing to the output.
    w2p = jnp.zeros((nh_p, n_output), jnp.float32)
    w2p = w2p.at[:n_hidden, :].set(w2.astype(jnp.float32))
    b2p = b2.reshape(1, -1).astype(jnp.float32)
    return w1p, b1p, w2p, b2p


@functools.partial(jax.jit, static_argnames=("block_b",))
def net_forward(x, w1p, b1p, w2p, b2p, block_b=2048):
    B, n_input = x.shape
    nh_p = w1p.shape[1]
    n_output = w2p.shape[1]

    cost = pl.CostEstimate(
        flops=2 * B * (n_input * nh_p + nh_p * n_output),
        transcendentals=0,
        bytes_accessed=(x.size * 4 + w1p.size * 2 + b1p.size * 4
                        + w2p.size * 4 + b2p.size * 4 + B * n_output * 4),
    )

    if B <= block_b:
        # Small/mid batch: one VMEM-resident block, no grid, no pipeline
        # prologue/epilogue.  Explicit VMEM memory spaces on every operand.
        return pl.pallas_call(
            mlp_kernel,
            out_shape=jax.ShapeDtypeStruct((B, n_output), jnp.float32),
            in_specs=[pl.BlockSpec(memory_space=pltpu.MemorySpace.VMEM)] * 5,
            out_specs=pl.BlockSpec(memory_space=pltpu.MemorySpace.VMEM),
            cost_estimate=cost,
        )(x, w1p, b1p, w2p, b2p)

    # Large batch: tile ONLY the batch axis.  Weights/biases use constant
    # index_maps so they are DMA'd once and stay VMEM-resident.  Tile size is
    # chosen so the grid has an even, >=2 number of "parallel" steps (v7x has
    # 2 TensorCores), each step as large as possible (<= block_b rows) to
    # amortize the ~0.35us/step pipeline overhead.  Ragged last block is
    # handled by Pallas (no explicit zero-pad copy of x).
    n_pairs = pl.cdiv(B, 2 * block_b)
    tb = _round_up(pl.cdiv(B, 2 * n_pairs), 8)
    grid = (pl.cdiv(B, tb),)

    # TODO(synk): consider pipeline_mode=pl.Buffered(1) on the constant-index
    # weight/bias specs to drop their redundant second VMEM buffer (~tens of KB).
    return pl.pallas_call(
        mlp_kernel,
        out_shape=jax.ShapeDtypeStruct((B, n_output), jnp.float32),
        grid=grid,
        in_specs=[
            pl.BlockSpec((tb, n_input), lambda i: (i, 0)),
            pl.BlockSpec((n_input, nh_p), lambda i: (0, 0)),
            pl.BlockSpec((1, nh_p), lambda i: (0, 0)),
            pl.BlockSpec((nh_p, n_output), lambda i: (0, 0)),
            pl.BlockSpec((1, n_output), lambda i: (0, 0)),
        ],
        out_specs=pl.BlockSpec((tb, n_output), lambda i: (i, 0)),
        compiler_params=pltpu.CompilerParams(
            dimension_semantics=("parallel",)),
        cost_estimate=cost,
    )(x, w1p, b1p, w2p, b2p)


def reference_forward(x, w1, b1, w2, b2):
    h = jnp.maximum(x @ w1 + b1, 0.0)
    return h @ w2 + b2


if __name__ == "__main__":
    # Shapes implied by Net(n_input, n_hidden, n_output) on a 2-D batch.
    B, n_input, n_hidden, n_output = 8, 32, 64, 16

    key = jax.random.PRNGKey(0)
    kx, kw1, kb1, kw2, kb2, kx2 = jax.random.split(key, 6)

    x = jax.random.normal(kx, (B, n_input), dtype=jnp.float32)
    # Deterministic parameter init (uniform, roughly matching nn.Linear scale);
    # weights stored transposed as (in_features, out_features).
    lim1 = 1.0 / jnp.sqrt(n_input)
    lim2 = 1.0 / jnp.sqrt(n_hidden)
    w1 = jax.random.uniform(kw1, (n_input, n_hidden), jnp.float32, -lim1, lim1)
    b1 = jax.random.uniform(kb1, (n_hidden,), jnp.float32, -lim1, lim1)
    w2 = jax.random.uniform(kw2, (n_hidden, n_output), jnp.float32, -lim2, lim2)
    b2 = jax.random.uniform(kb2, (n_output,), jnp.float32, -lim2, lim2)

    # One-time parameter prep (pad hidden dim to lane width, W1 -> bf16).
    w1p, b1p, w2p, b2p = prepare_params(w1, b1, w2, b2)

    # Small-batch (no-grid, fully VMEM-resident) path.
    out = net_forward(x, w1p, b1p, w2p, b2p)
    jax.block_until_ready(out)
    ref = reference_forward(x, w1, b1, w2, b2)
    assert out.shape == (B, n_output)
    # Only x/W1 are bf16-quantized (first matmul); second matmul is f32.
    assert jnp.allclose(out, ref, atol=2e-2, rtol=2e-2)

    # Large-batch (batch-tiled, even "parallel" grid, ragged last block) path.
    B2 = 2500
    x2 = jax.random.normal(kx2, (B2, n_input), dtype=jnp.float32)
    out2 = net_forward(x2, w1p, b1p, w2p, b2p)
    jax.block_until_ready(out2)
    ref2 = reference_forward(x2, w1, b1, w2, b2)
    assert out2.shape == (B2, n_output)
    assert jnp.allclose(out2, ref2, atol=2e-2, rtol=2e-2)

    print("KERNEL_OK")
</pallas_src>

<mosaic_0001>
module attributes {stable_mosaic.version = 11 : i64} {
  func.func @mlp_kernel(%arg0: memref<8x32xf32, #tpu.memory_space<vmem>>, %arg1: memref<32x128xbf16, #tpu.memory_space<vmem>>, %arg2: memref<1x128xf32, #tpu.memory_space<vmem>>, %arg3: memref<128x16xf32, #tpu.memory_space<vmem>>, %arg4: memref<1x16xf32, #tpu.memory_space<vmem>>, %arg5: memref<8x16xf32, #tpu.memory_space<vmem>>) attributes {dimension_semantics = [], scalar_prefetch = 0 : i64, scratch_operands = 0 : i64, tpu.core_type = #tpu.core_type<tc>} {
    %c0 = arith.constant 0 : index
    %c0_0 = arith.constant 0 : index
    %0 = vector.load %arg0[%c0, %c0_0] : memref<8x32xf32, #tpu.memory_space<vmem>>, vector<8x32xf32>
    %1 = arith.truncf %0 : vector<8x32xf32> to vector<8x32xbf16>
    %c0_1 = arith.constant 0 : index
    %c0_2 = arith.constant 0 : index
    %2 = vector.load %arg1[%c0_1, %c0_2] : memref<32x128xbf16, #tpu.memory_space<vmem>>, vector<32x128xbf16>
    %cst = arith.constant dense<0.000000e+00> : vector<8x128xf32>
    %3 = tpu.matmul %1, %2, %cst {dimension_numbers = #tpu.dot_dimension_numbers<[1], [0], [0], [1], [0, 0, 1, 1], [], []>} : vector<8x32xbf16>, vector<32x128xbf16>, vector<8x128xf32> -> vector<8x128xf32>
    %c0_3 = arith.constant 0 : index
    %c0_4 = arith.constant 0 : index
    %4 = vector.load %arg2[%c0_3, %c0_4] : memref<1x128xf32, #tpu.memory_space<vmem>>, vector<1x128xf32>
    %5 = vector.broadcast %4 : vector<1x128xf32> to vector<8x128xf32>
    %6 = arith.addf %3, %5 : vector<8x128xf32>
    %cst_5 = arith.constant 0.000000e+00 : f32
    %7 = vector.broadcast %cst_5 : f32 to vector<8x128xf32>
    %8 = arith.maximumf %6, %7 : vector<8x128xf32>
    %c0_6 = arith.constant 0 : index
    %c0_7 = arith.constant 0 : index
    %9 = vector.load %arg3[%c0_6, %c0_7] : memref<128x16xf32, #tpu.memory_space<vmem>>, vector<128x16xf32>
    %cst_8 = arith.constant dense<0.000000e+00> : vector<8x16xf32>
    %10 = tpu.matmul %8, %9, %cst_8 {dimension_numbers = #tpu.dot_dimension_numbers<[1], [0], [0], [1], [0, 0, 1, 1], [], []>} : vector<8x128xf32>, vector<128x16xf32>, vector<8x16xf32> -> vector<8x16xf32>
    %c0_9 = arith.constant 0 : index
    %c0_10 = arith.constant 0 : index
    %11 = vector.load %arg4[%c0_9, %c0_10] : memref<1x16xf32, #tpu.memory_space<vmem>>, vector<1x16xf32>
    %12 = vector.broadcast %11 : vector<1x16xf32> to vector<8x16xf32>
    %13 = arith.addf %10, %12 : vector<8x16xf32>
    %c0_11 = arith.constant 0 : index
    %c0_12 = arith.constant 0 : index
    %14 = vector.load %arg5[%c0_11, %c0_12] : memref<8x16xf32, #tpu.memory_space<vmem>>, vector<8x16xf32>
    tpu.vector_store %arg5[%c0_11, %c0_12], %13 {strides = array<i32>} : memref<8x16xf32, #tpu.memory_space<vmem>>, vector<8x16xf32>,
    return
  }
}

</mosaic_0001>

<llo_original>
// kernel: net_forward.1
$region0: #{net_forward.1}
  #allocation0 [shape = 'u32[]', space=smem, size = 0x4, offset = 0x4, fixed_abs, tag = 'smem constant byte address 0x4 - core index']
  #allocation1 [shape = 'u32[144,128]{1,0:T(1,128)}', space=vmem, size = 0x12000, scoped, tag = 'internal scratch']
  %s0 = inlined_call_operand.vmem [shape: f32[8,32], index: 0, kind: input, shape index: {}]
  %s1 = inlined_call_operand.vmem [shape: bf16[32,128], index: 1, kind: input, shape index: {}]
  %s2 = inlined_call_operand.vmem [shape: f32[1,128], index: 2, kind: input, shape index: {}]
  %s3 = inlined_call_operand.vmem [shape: f32[128,16], index: 3, kind: input, shape index: {}]
  %s4 = inlined_call_operand.vmem [shape: f32[1,16], index: 4, kind: input, shape index: {}]
  %s5 = inlined_call_operand.hbm [shape: f32[8,16], index: 5, kind: output, shape index: {}]
  %s6 = sld [smem:[#allocation0]]
  $region30: #{net_forward.1} parent=0
    _
  %s8 = ssub.s32 1, %s6
  %s9 = scalar_select 0, %s8, %s6
  $region1: #{net_forward.1} parent=0
    #allocation2 [shape = 'u8[4096]{0}', space=vmem, size = 0x1000, scoped, tag = 'output window, operand 0, single buffered']
    #allocation3 [shape = 's32[1]{0}', space=sflag, size = 0x4, scoped, tag = 'scoped memory for net_forward.1']
    %10 = vsyncpa [#allocation3], 0
    // Predicated region
    $region2: #{net_forward.1} parent=1 // pred_check
      _
    $region3: #{net_forward.1} parent=1 // pred_check_branch
      %12 = sbr.rel (0) target = $region5
    $region4: #{net_forward.1} parent=1 // pred_region
      _
    $region5: #{net_forward.1} parent=1 // pred_fallthru
      _
    // Predicated region
    $region6: #{net_forward.1} parent=1 // pred_check
      _
    $region7: #{net_forward.1} parent=1 // pred_check_branch
      %14 = sbr.rel (0) target = $region9
    $region8: #{net_forward.1} parent=1 // pred_region
      _
    $region9: #{net_forward.1} parent=1 // pred_fallthru
      _
    // Predicated region
    $region10: #{net_forward.1} parent=1 // pred_check
      _
    $region11: #{net_forward.1} parent=1 // pred_check_branch
      %16 = sbr.rel (0) target = $region13
    $region12: #{net_forward.1} parent=1 // pred_region
      _
    $region13: #{net_forward.1} parent=1 // pred_fallthru
      _
    // Predicated region
    $region14: #{net_forward.1} parent=1 // pred_check
      _
    $region15: #{net_forward.1} parent=1 // pred_check_branch
      %18 = sbr.rel (0) target = $region17
    $region16: #{net_forward.1} parent=1 // pred_region
      _
    $region17: #{net_forward.1} parent=1 // pred_fallthru
      _
    // Predicated region
    $region18: #{net_forward.1} parent=1 // pred_check
      _
    $region19: #{net_forward.1} parent=1 // pred_check_branch
      %20 = sbr.rel (0) target = $region21
    $region20: #{net_forward.1} parent=1 // pred_region
      _
    $region21: #{net_forward.1} parent=1 // pred_fallthru
      _
    %v22 = vld [vmem:[%s0] sm:$0xff]
    %v23 = vpack.c.bf16 %v22, %v22
    %v24 = vld [vmem:[%s1] sm:$0xf]
    %v25 = vld [vmem:[%s1 + $0x4] sm:$0xf]
    %v26 = vld [vmem:[%s1 + $0x8] sm:$0xf]
    %v27 = vld [vmem:[%s1 + $0xc] sm:$0xf]
    %v28 = vld [vmem:[%s2] sm:$0x1]
    %v30 = vlaneseq
    %v31 = vshrl.u32 %v30, 7
    %v32 = vsub.s32 0, %v31
    %v33 = vrot.slane %v28, %v32
    %v39 = vunpack.c.l.b16 %v24
    %v40 = vunpack.c.l.b16 %v25
    %v41 = vunpack.c.l.b16 %v26
    %v42 = vunpack.c.l.b16 %v27
    %v43 = vpack.c.b16 %v40, %v39
    %v44 = vpack.c.b16 %v42, %v41
    %vm47 = vcmask 261120
    %v49 = vsel %vm47, %v23, 0
    %51 = vmatprep.subr.bf16.mxu0 0
    %52 = vmatpush1.bf16.msra.mxu0 %v43
    %53 = vmatprep.subr.bf16.mxu0 0
    %54 = vmatpush1.bf16.msra.mxu0 %v44
    %55 = vmatprep.subr.bf16.mxu0 0
    %56 = vmatpush1.bf16.msra.mxu0 0
    %57 = vmatprep.subr.bf16.mxu0 0
    %58 = vmatpush1.bf16.msra.mxu0 0
    %59 = vmatprep.subr.bf16.mxu0 0
    %60 = vmatpush1.bf16.msra.mxu0 0
    %61 = vmatprep.subr.bf16.mxu0 0
    %62 = vmatpush1.bf16.msra.mxu0 0
    %63 = vmatprep.subr.bf16.mxu0 0
    %64 = vmatpush1.bf16.msra.mxu0 0
    %65 = vmatprep.subr.bf16.mxu0 0
    %66 = vmatpush1.bf16.msra.mxu0 0
    %67 = vmatprep.subr.bf16.mxu0 0
    %68 = vmatpush1.bf16.msra.mxu0 0
    %69 = vmatprep.subr.bf16.mxu0 0
    %70 = vmatpush1.bf16.msra.mxu0 0
    %71 = vmatprep.subr.bf16.mxu0 0
    %72 = vmatpush1.bf16.msra.mxu0 0
    %73 = vmatprep.subr.bf16.mxu0 0
    %74 = vmatpush1.bf16.msra.mxu0 0
    %75 = vmatprep.subr.bf16.mxu0 0
    %76 = vmatpush1.bf16.msra.mxu0 0
    %77 = vmatprep.subr.bf16.mxu0 0
    %78 = vmatpush1.bf16.msra.mxu0 0
    %79 = vmatprep.subr.bf16.mxu0 0
    %80 = vmatpush1.bf16.msra.mxu0 0
    %81 = vmatprep.subr.bf16.mxu0 0
    %82 = vmatpush1.bf16.msra.mxu0 0
    %83 = vmatprep.mubr.bf16.mxu0 0
    %84 = vmatmul.mubr.bf16.gmra.mrb[0].mxu0 %v49
    %v85 = vpop.f32.mrb[0].mxu0
    %v86 = vadd.f32 %v33, %v85
    %v87 = vpop.f32.mrb[0].mxu0
    %v88 = vpop.f32.mrb[0].mxu0
    %v89 = vpop.f32.mrb[0].mxu0
    %90 = vdwg.mxu0
    %v91 = vmax.f32 %v86, 0.0
    %v92 = vld [vmem:[%s3] sm:$0xff]
    %v93 = vld [vmem:[%s3 + $0x8] sm:$0xff]
    %v94 = vld [vmem:[%s3 + $0x10] sm:$0xff]
    %v95 = vld [vmem:[%s3 + $0x18] sm:$0xff]
    %v96 = vld [vmem:[%s3 + $0x20] sm:$0xff]
    %v97 = vld [vmem:[%s3 + $0x28] sm:$0xff]
    %v98 = vld [vmem:[%s3 + $0x30] sm:$0xff]
    %v99 = vld [vmem:[%s3 + $0x38] sm:$0xff]
    %v100 = vld [vmem:[%s3 + $0x40] sm:$0xff]
    %v101 = vld [vmem:[%s3 + $0x48] sm:$0xff]
    %v102 = vld [vmem:[%s3 + $0x50] sm:$0xff]
    %v103 = vld [vmem:[%s3 + $0x58] sm:$0xff]
    %v104 = vld [vmem:[%s3 + $0x60] sm:$0xff]
    %v105 = vld [vmem:[%s3 + $0x68] sm:$0xff]
    %v106 = vld [vmem:[%s3 + $0x70] sm:$0xff]
    %v107 = vld [vmem:[%s3 + $0x78] sm:$0xff]
    %v108 = vld [vmem:[%s4] sm:$0x1]
    %v110 = vlaneseq
    %v111 = vshrl.u32 %v110, 7
    %v112 = vsub.s32 0, %v111
    %v113 = vrot.slane %v108, %v112
    %115 = vmatprep.subr.mxu0 0.0
    %116 = vmatpush1.msra.mxu0 %v92
    %117 = vmatprep.subr.mxu0 0.0
    %118 = vmatpush1.msra.mxu0 %v93
    %119 = vmatprep.subr.mxu0 0.0
    %120 = vmatpush1.msra.mxu0 %v94
    %121 = vmatprep.subr.mxu0 0.0
    %122 = vmatpush1.msra.mxu0 %v95
    %123 = vmatprep.subr.mxu0 0.0
    %124 = vmatpush1.msra.mxu0 %v96
    %125 = vmatprep.subr.mxu0 0.0
    %126 = vmatpush1.msra.mxu0 %v97
    %127 = vmatprep.subr.mxu0 0.0
    %128 = vmatpush1.msra.mxu0 %v98
    %129 = vmatprep.subr.mxu0 0.0
    %130 = vmatpush1.msra.mxu0 %v99
    %131 = vmatprep.subr.mxu0 0.0
    %132 = vmatpush1.msra.mxu0 %v100
    %133 = vmatprep.subr.mxu0 0.0
    %134 = vmatpush1.msra.mxu0 %v101
    %135 = vmatprep.subr.mxu0 0.0
    %136 = vmatpush1.msra.mxu0 %v102
    %137 = vmatprep.subr.mxu0 0.0
    %138 = vmatpush1.msra.mxu0 %v103
    %139 = vmatprep.subr.mxu0 0.0
    %140 = vmatpush1.msra.mxu0 %v104
    %141 = vmatprep.subr.mxu0 0.0
    %142 = vmatpush1.msra.mxu0 %v105
    %143 = vmatprep.subr.mxu0 0.0
    %144 = vmatpush1.msra.mxu0 %v106
    %145 = vmatprep.subr.mxu0 0.0
    %146 = vmatpush1.msra.mxu0 %v107
    %147 = vmatprep.subr.mxu0 0.0
    %148 = vmatpush1.msra.mxu0 0.0
    %149 = vmatprep.subr.mxu0 0.0
    %150 = vmatpush1.msra.mxu0 0.0
    %151 = vmatprep.subr.mxu0 0.0
    %152 = vmatpush1.msra.mxu0 0.0
    %153 = vmatprep.subr.mxu0 0.0
    %154 = vmatpush1.msra.mxu0 0.0
    %155 = vmatprep.subr.mxu0 0.0
    %156 = vmatpush1.msra.mxu0 0.0
    %157 = vmatprep.subr.mxu0 0.0
    %158 = vmatpush1.msra.mxu0 0.0
    %159 = vmatprep.subr.mxu0 0.0
    %160 = vmatpush1.msra.mxu0 0.0
    %161 = vmatprep.subr.mxu0 0.0
    %162 = vmatpush1.msra.mxu0 0.0
    %163 = vmatprep.subr.mxu0 0.0
    %164 = vmatpush1.msra.mxu0 0.0
    %165 = vmatprep.subr.mxu0 0.0
    %166 = vmatpush1.msra.mxu0 0.0
    %167 = vmatprep.subr.mxu0 0.0
    %168 = vmatpush1.msra.mxu0 0.0
    %169 = vmatprep.subr.mxu0 0.0
    %170 = vmatpush1.msra.mxu0 0.0
    %171 = vmatprep.subr.mxu0 0.0
    %172 = vmatpush1.msra.mxu0 0.0
    %173 = vmatprep.subr.mxu0 0.0
    %174 = vmatpush1.msra.mxu0 0.0
    %175 = vmatprep.subr.mxu0 0.0
    %176 = vmatpush1.msra.mxu0 0.0
    %177 = vmatprep.subr.mxu0 0.0
    %178 = vmatpush1.msra.mxu0 0.0
    %179 = vmatprep.mubr.f32.mxu0 0.0
    %180 = vmatmul.mubr.f32.gmra.mrb[0].mxu0 %v91
    %v181 = vpop.f32.mrb[0].mxu0
    %v182 = vadd.f32 %v113, %v181
    %v183 = vpop.f32.mrb[0].mxu0
    %184 = vdwg.mxu0
    %vm185 = vcmask 130048
    %186 = vst.msk [vmem:[#allocation2] sm:$0xff] %vm185, %v182
    // Predicated region
    $region22: #{net_forward.1} parent=1 // pred_check
      _
    $region23: #{net_forward.1} parent=1 // pred_check_branch
      %188 = sbr.rel (0) target = $region25
    $region24: #{net_forward.1} parent=1 // pred_region
      %s190 = ssub.s32 128, 128
      %191 = vsyncadd [#allocation3], %s190
      %s193 = sshll.u32 [#allocation2], 4
      %s194 = int_to_ptr.vmem [resolvable:$true] %s193
      %196 = dma.vmem_to_hbm [thread:$0]  %s194, 128, %s5, [#allocation3]
    $region25: #{net_forward.1} parent=1 // pred_fallthru
      _
    // Predicated region
    $region26: #{net_forward.1} parent=1 // pred_check
      _
    $region27: #{net_forward.1} parent=1 // pred_check_branch
      %198 = sbr.rel (0) target = $region29
    $region28: #{net_forward.1} parent=1 // pred_region
      %199 = dma.done [#allocation3], 128
    $region29: #{net_forward.1} parent=1 // pred_fallthru
      _
    %200 = vsyncpa [#allocation3], 1

</llo_original>
